<compile_context>
chip_gen: v6e
topology: v6e:2x2x1
jax: 0.10.0
libtpu: 0.0.40
codegen_flags: <defaults>
</compile_context>

<pallas_src>
import jax
import jax.numpy as jnp
from jax.experimental import pallas as pl
from jax.experimental.pallas import tpu as pltpu


def _round_up(x, m):
    return ((x + m - 1) // m) * m


def _edge_decoder_kernel(zm_ref, za_ref, w1m_ref, w1a_ref, b1_ref, w2_ref,
                         b2_ref, o_ref):
    """One edge tile: (relu(zm @ W1m + za @ W1a + b1) * w2).sum(-1) + b2.

    zm_ref : (TE, H)  gathered movie embeddings for this tile (pipelined)
    za_ref : (TE, H)  gathered actor embeddings for this tile (pipelined)
    w1m_ref: (H, H)   first half of lin1 weight   (VMEM-resident)
    w1a_ref: (H, H)   second half of lin1 weight  (VMEM-resident)
    b1_ref : (1, H)
    w2_ref : (1, H)   lin2 weight laid out as a row
    b2_ref : (1, 1)
    o_ref  : (TE, 1)
    """
    h = (
        jnp.dot(zm_ref[...], w1m_ref[...], preferred_element_type=jnp.float32)
        + jnp.dot(za_ref[...], w1a_ref[...], preferred_element_type=jnp.float32)
        + b1_ref[...]
    )
    h = jnp.maximum(h, 0.0)  # ReLU
    # lin2 (H -> 1): VPU multiply + cross-lane reduction (an N=1 MXU matmul
    # would use a single output column — pure drain latency for no work).
    out = jnp.sum(h * w2_ref[...], axis=-1, keepdims=True) + b2_ref[...]
    o_ref[...] = out.astype(o_ref.dtype)


def edge_decoder_forward(z_movie, z_actor, edge_label_index, params,
                         *, tile_edges=8192):
    """Forward pass matching EdgeDecoder.forward.

    z_movie: (N_movie, H) float32
    z_actor: (N_actor, H) float32
    edge_label_index: (2, E) int32  -- [row (movie idx), col (actor idx)]
    params: dict with w1 (2H,H), b1 (H,), w2 (H,1), b2 (1,)
    returns: (E,) float32
    """
    row, col = edge_label_index[0], edge_label_index[1]
    zm = z_movie[row]  # (E, H) gathered movie embeddings
    za = z_actor[col]  # (E, H) gathered actor embeddings
    # TODO(synk): for large E with small embedding tables, keep the tables
    # VMEM-resident and gather in-kernel from scalar-prefetched indices to cut
    # HBM traffic further (indices + output only, ~3x less traffic).

    E, H = zm.shape
    itemsize = jnp.dtype(zm.dtype).itemsize

    # Tile selection: biggest tile that (a) covers E, (b) keeps the
    # double-buffered input slabs under ~8 MiB of VMEM (safe on every chip).
    max_in_bytes = 8 * 1024 * 1024
    bytes_per_edge = 2 * H * itemsize * 2      # two inputs, double-buffered
    te_cap = max(8, (max_in_bytes // bytes_per_edge) // 8 * 8)
    te = min(_round_up(tile_edges, 8), _round_up(E, 8), te_cap)
    e_pad = _round_up(E, te)
    if e_pad != E:
        zm = jnp.pad(zm, ((0, e_pad - E), (0, 0)))
        za = jnp.pad(za, ((0, e_pad - E), (0, 0)))

    w1 = params["w1"]                    # (2H, H)
    w1m = w1[:H]                         # (H, H)  acts on the movie half
    w1a = w1[H:]                         # (H, H)  acts on the actor half
    b1 = params["b1"].reshape(1, H)      # (1, H)
    w2_row = params["w2"].reshape(1, H)  # (1, H)
    b2 = params["b2"].reshape(1, 1)      # (1, 1)

    flops = 2 * e_pad * H * (2 * H) + 3 * e_pad * H      # lin1 + relu/lin2
    bytes_accessed = (2 * e_pad * H + 2 * H * H + 3 * H + 1 + e_pad) * itemsize

    grid = (e_pad // te,)
    out = pl.pallas_call(
        _edge_decoder_kernel,
        out_shape=jax.ShapeDtypeStruct((e_pad, 1), jnp.float32),
        grid_spec=pltpu.PrefetchScalarGridSpec(
            num_scalar_prefetch=0,
            grid=grid,
            in_specs=[
                pl.BlockSpec((te, H), lambda i: (i, 0)),   # zm tile (pipelined)
                pl.BlockSpec((te, H), lambda i: (i, 0)),   # za tile (pipelined)
                pl.BlockSpec((H, H), lambda i: (0, 0)),    # W1_movie (resident)
                pl.BlockSpec((H, H), lambda i: (0, 0)),    # W1_actor (resident)
                pl.BlockSpec((1, H), lambda i: (0, 0)),    # b1       (resident)
                pl.BlockSpec((1, H), lambda i: (0, 0)),    # w2 row   (resident)
                pl.BlockSpec((1, 1), lambda i: (0, 0)),    # b2       (resident)
            ],
            out_specs=pl.BlockSpec((te, 1), lambda i: (i, 0)),
        ),
        compiler_params=pltpu.CompilerParams(
            dimension_semantics=("parallel",),     # shard edge tiles over TCs
            vmem_limit_bytes=32 * 1024 * 1024,     # explicit; v5e default is 16 MiB
        ),
        cost_estimate=pl.CostEstimate(
            flops=int(flops), transcendentals=0,
            bytes_accessed=int(bytes_accessed)),
    )(zm, za, w1m, w1a, b1, w2_row, b2)

    return out[:E, 0]  # z.view(-1)


def init_params(key, hidden_channels):
    """Deterministic init of lin1 (2H->H) and lin2 (H->1) parameters."""
    k1, k2, k3, k4 = jax.random.split(key, 4)
    two_h = 2 * hidden_channels
    lim1 = 1.0 / (two_h ** 0.5)
    lim2 = 1.0 / (hidden_channels ** 0.5)
    return {
        "w1": jax.random.uniform(k1, (two_h, hidden_channels), jnp.float32, -lim1, lim1),
        "b1": jax.random.uniform(k2, (hidden_channels,), jnp.float32, -lim1, lim1),
        "w2": jax.random.uniform(k3, (hidden_channels, 1), jnp.float32, -lim2, lim2),
        "b2": jax.random.uniform(k4, (1,), jnp.float32, -lim2, lim2),
    }


if __name__ == "__main__":
    key = jax.random.PRNGKey(0)
    k_params, k_movie, k_actor, k_row, k_col = jax.random.split(key, 5)

    hidden = 32
    n_movie, n_actor = 10, 12
    n_edges = 20

    params = init_params(k_params, hidden)
    z_movie = jax.random.normal(k_movie, (n_movie, hidden), jnp.float32)
    z_actor = jax.random.normal(k_actor, (n_actor, hidden), jnp.float32)
    row = jax.random.randint(k_row, (n_edges,), 0, n_movie, jnp.int32)
    col = jax.random.randint(k_col, (n_edges,), 0, n_actor, jnp.int32)
    edge_label_index = jnp.stack([row, col], axis=0)  # (2, E)

    # Multi-tile path: 3 tiles of 8 edges (last tile zero-padded).
    out_tiled = edge_decoder_forward(z_movie, z_actor, edge_label_index, params,
                                     tile_edges=8)
    # Default path: single tile covering all (padded) edges.
    out_default = edge_decoder_forward(z_movie, z_actor, edge_label_index, params)
    out_tiled, out_default = jax.block_until_ready((out_tiled, out_default))

    # Pure-JAX reference (matches the PyTorch module).
    z_ref = jnp.concatenate([z_movie[row], z_actor[col]], axis=-1)
    h_ref = jnp.maximum(z_ref @ params["w1"] + params["b1"], 0.0)
    ref = (h_ref @ params["w2"] + params["b2"]).reshape(-1)

    assert out_tiled.shape == (n_edges,)
    assert out_default.shape == (n_edges,)
    assert jnp.allclose(out_tiled, ref, atol=1e-4, rtol=1e-4)
    assert jnp.allclose(out_default, ref, atol=1e-4, rtol=1e-4)

    print("KERNEL_OK")
</pallas_src>

<mosaic_0001>
module attributes {stable_mosaic.version = 11 : i64} {
  func.func @_edge_decoder_kernel(%arg0: i32, %arg1: memref<8x32xf32, #tpu.memory_space<vmem>>, %arg2: memref<8x32xf32, #tpu.memory_space<vmem>>, %arg3: memref<32x32xf32, #tpu.memory_space<vmem>>, %arg4: memref<32x32xf32, #tpu.memory_space<vmem>>, %arg5: memref<1x32xf32, #tpu.memory_space<vmem>>, %arg6: memref<1x32xf32, #tpu.memory_space<vmem>>, %arg7: memref<1x1xf32, #tpu.memory_space<vmem>>, %arg8: memref<8x1xf32, #tpu.memory_space<vmem>>) attributes {dimension_semantics = [#tpu.dimension_semantics<parallel>], iteration_bounds = array<i64: 3>, scalar_prefetch = 0 : i64, scratch_operands = 0 : i64, tpu.core_type = #tpu.core_type<tc>, window_params = [{transform_indices = @transform_0, window_bounds = array<i64: 8, 32>}, {transform_indices = @transform_1, window_bounds = array<i64: 8, 32>}, {pipeline_mode = #tpu.pipeline_mode<synchronous>, transform_indices = @transform_2, window_bounds = array<i64: 32, 32>}, {pipeline_mode = #tpu.pipeline_mode<synchronous>, transform_indices = @transform_3, window_bounds = array<i64: 32, 32>}, {pipeline_mode = #tpu.pipeline_mode<synchronous>, transform_indices = @transform_4, window_bounds = array<i64: 1, 32>}, {pipeline_mode = #tpu.pipeline_mode<synchronous>, transform_indices = @transform_5, window_bounds = array<i64: 1, 32>}, {pipeline_mode = #tpu.pipeline_mode<synchronous>, transform_indices = @transform_6, window_bounds = array<i64: 1, 1>}, {transform_indices = @transform_7, window_bounds = array<i64: 8, 1>}]} {
    %c0 = arith.constant 0 : index
    %c0_0 = arith.constant 0 : index
    %0 = vector.load %arg1[%c0, %c0_0] : memref<8x32xf32, #tpu.memory_space<vmem>>, vector<8x32xf32>
    %c0_1 = arith.constant 0 : index
    %c0_2 = arith.constant 0 : index
    %1 = vector.load %arg3[%c0_1, %c0_2] : memref<32x32xf32, #tpu.memory_space<vmem>>, vector<32x32xf32>
    %cst = arith.constant dense<0.000000e+00> : vector<8x32xf32>
    %2 = tpu.matmul %0, %1, %cst {dimension_numbers = #tpu.dot_dimension_numbers<[1], [0], [0], [1], [0, 0, 1, 1], [], []>} : vector<8x32xf32>, vector<32x32xf32>, vector<8x32xf32> -> vector<8x32xf32>
    %c0_3 = arith.constant 0 : index
    %c0_4 = arith.constant 0 : index
    %3 = vector.load %arg2[%c0_3, %c0_4] : memref<8x32xf32, #tpu.memory_space<vmem>>, vector<8x32xf32>
    %c0_5 = arith.constant 0 : index
    %c0_6 = arith.constant 0 : index
    %4 = vector.load %arg4[%c0_5, %c0_6] : memref<32x32xf32, #tpu.memory_space<vmem>>, vector<32x32xf32>
    %cst_7 = arith.constant dense<0.000000e+00> : vector<8x32xf32>
    %5 = tpu.matmul %3, %4, %cst_7 {dimension_numbers = #tpu.dot_dimension_numbers<[1], [0], [0], [1], [0, 0, 1, 1], [], []>} : vector<8x32xf32>, vector<32x32xf32>, vector<8x32xf32> -> vector<8x32xf32>
    %6 = arith.addf %2, %5 : vector<8x32xf32>
    %c0_8 = arith.constant 0 : index
    %c0_9 = arith.constant 0 : index
    %7 = vector.load %arg5[%c0_8, %c0_9] : memref<1x32xf32, #tpu.memory_space<vmem>>, vector<1x32xf32>
    %8 = vector.broadcast %7 : vector<1x32xf32> to vector<8x32xf32>
    %9 = arith.addf %6, %8 : vector<8x32xf32>
    %cst_10 = arith.constant 0.000000e+00 : f32
    %10 = vector.broadcast %cst_10 : f32 to vector<8x32xf32>
    %11 = arith.maximumf %9, %10 : vector<8x32xf32>
    %c0_11 = arith.constant 0 : index
    %c0_12 = arith.constant 0 : index
    %12 = vector.load %arg6[%c0_11, %c0_12] : memref<1x32xf32, #tpu.memory_space<vmem>>, vector<1x32xf32>
    %13 = vector.broadcast %12 : vector<1x32xf32> to vector<8x32xf32>
    %14 = arith.mulf %11, %13 : vector<8x32xf32>
    %cst_13 = arith.constant dense<0.000000e+00> : vector<8xf32>
    %15 = vector.multi_reduction <add>, %14, %cst_13 [1] : vector<8x32xf32> to vector<8xf32>
    %16 = vector.shape_cast %15 : vector<8xf32> to vector<8x1xf32>
    %c0_14 = arith.constant 0 : index
    %c0_15 = arith.constant 0 : index
    %17 = vector.load %arg7[%c0_14, %c0_15] : memref<1x1xf32, #tpu.memory_space<vmem>>, vector<1x1xf32>
    %18 = vector.broadcast %17 : vector<1x1xf32> to vector<8x1xf32>
    %19 = arith.addf %16, %18 : vector<8x1xf32>
    %c0_16 = arith.constant 0 : index
    %c0_17 = arith.constant 0 : index
    %20 = vector.load %arg8[%c0_16, %c0_17] : memref<8x1xf32, #tpu.memory_space<vmem>>, vector<8x1xf32>
    tpu.vector_store %arg8[%c0_16, %c0_17], %19 {strides = array<i32>} : memref<8x1xf32, #tpu.memory_space<vmem>>, vector<8x1xf32>,
    return
  }
  func.func @transform_0(%arg0: i32) -> (i32, i32) {
    %c0_i32 = arith.constant 0 : i32
    %c0_i32_0 = arith.constant 0 : i32
    return %arg0, %c0_i32 : i32, i32
  }
  func.func @transform_1(%arg0: i32) -> (i32, i32) {
    %c0_i32 = arith.constant 0 : i32
    %c0_i32_0 = arith.constant 0 : i32
    return %arg0, %c0_i32 : i32, i32
  }
  func.func @transform_2(%arg0: i32) -> (i32, i32) {
    %c0_i32 = arith.constant 0 : i32
    %c0_i32_0 = arith.constant 0 : i32
    %c0_i32_1 = arith.constant 0 : i32
    return %c0_i32, %c0_i32_0 : i32, i32
  }
  func.func @transform_3(%arg0: i32) -> (i32, i32) {
    %c0_i32 = arith.constant 0 : i32
    %c0_i32_0 = arith.constant 0 : i32
    %c0_i32_1 = arith.constant 0 : i32
    return %c0_i32, %c0_i32_0 : i32, i32
  }
  func.func @transform_4(%arg0: i32) -> (i32, i32) {
    %c0_i32 = arith.constant 0 : i32
    %c0_i32_0 = arith.constant 0 : i32
    %c0_i32_1 = arith.constant 0 : i32
    return %c0_i32, %c0_i32_0 : i32, i32
  }
  func.func @transform_5(%arg0: i32) -> (i32, i32) {
    %c0_i32 = arith.constant 0 : i32
    %c0_i32_0 = arith.constant 0 : i32
    %c0_i32_1 = arith.constant 0 : i32
    return %c0_i32, %c0_i32_0 : i32, i32
  }
  func.func @transform_6(%arg0: i32) -> (i32, i32) {
    %c0_i32 = arith.constant 0 : i32
    %c0_i32_0 = arith.constant 0 : i32
    %c0_i32_1 = arith.constant 0 : i32
    return %c0_i32, %c0_i32_0 : i32, i32
  }
  func.func @transform_7(%arg0: i32) -> (i32, i32) {
    %c0_i32 = arith.constant 0 : i32
    %c0_i32_0 = arith.constant 0 : i32
    return %arg0, %c0_i32 : i32, i32
  }
}

</mosaic_0001>

<llo_original>
// kernel: tpu_custom_call.1
$region0: #{tpu_custom_call.1}
  #allocation0 [shape = 'u32[]', space=smem, size = 0x4, offset = 0x4, fixed_abs, tag = 'smem constant byte address 0x4 - core index']
  #allocation1 [shape = 'u32[144,128]{1,0:T(1,128)}', space=vmem, size = 0x12000, scoped, tag = 'internal scratch']
  #allocation2 [shape = 'f32[1,1]{1,0:T(1,128)S(1)}', space=vmem, size = 0x200, scoped, tag = 'scoped memory for tpu_custom_call.1']
  %s0 = inlined_call_operand.hbm [shape: f32[24,32], index: 0, kind: input, shape index: {}]
  %s1 = inlined_call_operand.hbm [shape: f32[24,32], index: 1, kind: input, shape index: {}]
  %s2 = inlined_call_operand.hbm [shape: f32[32,32], index: 2, kind: input, shape index: {}]
  %s3 = inlined_call_operand.hbm [shape: f32[32,32], index: 3, kind: input, shape index: {}]
  %s4 = inlined_call_operand.vmem [shape: f32[1,32], index: 4, kind: input, shape index: {}]
  %s5 = inlined_call_operand.vmem [shape: f32[1,32], index: 5, kind: input, shape index: {}]
  %s6 = inlined_call_operand.<no memory space> [shape: f32[1,1], index: 6, kind: input, shape index: {}]
  %s7 = inlined_call_operand.vmem [shape: f32[24,1], index: 7, kind: output, shape index: {}]
  %s8 = sld [smem:[#allocation0]]
  $region77: #{tpu_custom_call.1} parent=0
    _
  %s10 = ssub.s32 1, %s8
  %s11 = scalar_select 0, %s10, %s8
  %v12 = vstv %s6
  %13 = vst [vmem:[#allocation2] sm:$0x1] %v12
  $region1: #{tpu_custom_call.1} parent=0
    #allocation3 [shape = 'u8[8192]{0}', space=vmem, size = 0x2000, scoped, tag = 'input window, operand 0']
    #allocation4 [shape = 's32[2]{0}', space=sflag, size = 0x8, scoped, tag = 'scoped memory for tpu_custom_call.1']
    #allocation5 [shape = 'u8[8192]{0}', space=vmem, size = 0x2000, scoped, tag = 'input window, operand 1']
    #allocation6 [shape = 's32[2]{0}', space=sflag, size = 0x8, scoped, tag = 'scoped memory for tpu_custom_call.1']
    #allocation7 [shape = 'u8[16384]{0}', space=vmem, size = 0x4000, scoped, tag = 'input window, operand 2, single buffered']
    #allocation8 [shape = 'u8[16384]{0}', space=vmem, size = 0x4000, scoped, tag = 'input window, operand 3, single buffered']
    #allocation9 [shape = 's32[1]{0}', space=sflag, size = 0x4, scoped, tag = 'scoped memory for tpu_custom_call.1']
    %14 = vsyncpa [#allocation4], 0
    %s15 = scalar_lea.sflag [#allocation4], 1
    %16 = vsyncpa %s15, 0
    %17 = vsyncpa [#allocation6], 0
    %s18 = scalar_lea.sflag [#allocation6], 1
    %19 = vsyncpa %s18, 0
    %20 = vsyncpa [#allocation9], 0
    loop: start=0, step=1, limit=5
    $region2: #{tpu_custom_call.1} parent=1 // loop_pre_header
      _
    $region3: #{tpu_custom_call.1} parent=1 // loop_header
      %s22 = sphi 0, %s26
      %p23 = scmp.ge.s32.totalorder %s22, 5
      %s32 = sphi 0, %s34
      %s35 = sphi 0, %s32
      %s36 = sphi 0, %s35
      %s52 = sphi 0, %s36
      %s58 = sphi 0, %s60
      %s61 = sphi 0, %s58
      %s62 = sphi 0, %s61
      %s78 = sphi 0, %s62
      %s82 = sphi 0, %s82
      %s84 = sphi 0, %s82
      %s85 = sphi 0, %s84
      %s99 = sphi 0, %s85
      %s103 = sphi 0, %s103
      %s105 = sphi 0, %s103
      %s106 = sphi 0, %s105
      %s120 = sphi 0, %s106
      %s124 = sphi 0, %s124
      %s126 = sphi 0, %s124
      %s127 = sphi 0, %s126
      %s141 = sphi 0, %s127
      %s145 = sphi 0, %s145
      %s147 = sphi 0, %s145
      %s148 = sphi 0, %s147
      %s162 = sphi 0, %s148
      %s166 = sphi 0, %s166
      %s168 = sphi 0, %s166
      %s169 = sphi 0, %s168
      %s183 = sphi 0, %s169
      %s189 = sphi 0, %s191
      %s192 = sphi 0, %s189
      %s193 = sphi 0, %s192
      %s209 = sphi 0, %s193
    $region4: #{tpu_custom_call.1} parent=1 // loop_header_branch
      %25 = sbr.rel (%p23) target = $region8
    $region5: #{tpu_custom_call.1} parent=1 // loop_body
      %s27 = ssub.s32 %s22, 1
      %s28 = ssub.s32 %s22, 2
      %s29 = sadd.s32 %s22, 1
      %s30 = ssub.s32 %s22, %s29
      %p31 = scmp.eq.s32.totalorder %s30, 0
      %s33 = sadd.s32 %s32, 1
      %s34 = scalar_select %p31, %s32, %s33
      %p37 = pneg %p31
      %p38 = scmp.eq.s32.totalorder %s22, 2
      %p39 = por %p37, %p38
      %p40 = scmp.ne.s32.totalorder %s32, %s35
      %p41 = scmp.eq.s32.totalorder %s22, 0
      %p42 = por %p40, %p41
      %p43 = scmp.ne.s32.totalorder %s32, %s35
      %p44 = scmp.eq.s32.totalorder %s27, 2
      %p45 = por %p43, %p44
      %p46 = scmp.ne.s32.totalorder %s35, %s36
      %p47 = scmp.eq.s32.totalorder %s27, 0
      %p48 = por %p46, %p47
      %p49 = scmp.ne.s32.totalorder %s35, %s36
      %p50 = scmp.eq.s32.totalorder %s28, 2
      %p51 = por %p49, %p50
      %p53 = scmp.ne.s32.totalorder %s36, %s52
      %p54 = scmp.eq.s32.totalorder %s28, 0
      %p55 = por %p53, %p54
      %s56 = ssub.s32 %s22, %s29
      %p57 = scmp.eq.s32.totalorder %s56, 0
      %s59 = sadd.s32 %s58, 1
      %s60 = scalar_select %p57, %s58, %s59
      %p63 = pneg %p57
      %p64 = scmp.eq.s32.totalorder %s22, 2
      %p65 = por %p63, %p64
      %p66 = scmp.ne.s32.totalorder %s58, %s61
      %p67 = scmp.eq.s32.totalorder %s22, 0
      %p68 = por %p66, %p67
      %p69 = scmp.ne.s32.totalorder %s58, %s61
      %p70 = scmp.eq.s32.totalorder %s27, 2
      %p71 = por %p69, %p70
      %p72 = scmp.ne.s32.totalorder %s61, %s62
      %p73 = scmp.eq.s32.totalorder %s27, 0
      %p74 = por %p72, %p73
      %p75 = scmp.ne.s32.totalorder %s61, %s62
      %p76 = scmp.eq.s32.totalorder %s28, 2
      %p77 = por %p75, %p76
      %p79 = scmp.ne.s32.totalorder %s62, %s78
      %p80 = scmp.eq.s32.totalorder %s28, 0
      %p81 = por %p79, %p80
      %s83 = sadd.s32 %s82, 1
      %p86 = scmp.eq.s32.totalorder %s22, 2
      %p87 = scmp.ne.s32.totalorder %s82, %s84
      %p88 = scmp.eq.s32.totalorder %s22, 0
      %p89 = por %p87, %p88
      %p90 = scmp.ne.s32.totalorder %s82, %s84
      %p91 = scmp.eq.s32.totalorder %s27, 2
      %p92 = por %p90, %p91
      %p93 = scmp.ne.s32.totalorder %s84, %s85
      %p94 = scmp.eq.s32.totalorder %s27, 0
      %p95 = por %p93, %p94
      %p96 = scmp.ne.s32.totalorder %s84, %s85
      %p97 = scmp.eq.s32.totalorder %s28, 2
      %p98 = por %p96, %p97
      %p100 = scmp.ne.s32.totalorder %s85, %s99
      %p101 = scmp.eq.s32.totalorder %s28, 0
      %p102 = por %p100, %p101
      %s104 = sadd.s32 %s103, 1
      %p107 = scmp.eq.s32.totalorder %s22, 2
      %p108 = scmp.ne.s32.totalorder %s103, %s105
      %p109 = scmp.eq.s32.totalorder %s22, 0
      %p110 = por %p108, %p109
      %p111 = scmp.ne.s32.totalorder %s103, %s105
      %p112 = scmp.eq.s32.totalorder %s27, 2
      %p113 = por %p111, %p112
      %p114 = scmp.ne.s32.totalorder %s105, %s106
      %p115 = scmp.eq.s32.totalorder %s27, 0
      %p116 = por %p114, %p115
      %p117 = scmp.ne.s32.totalorder %s105, %s106
      %p118 = scmp.eq.s32.totalorder %s28, 2
      %p119 = por %p117, %p118
      %p121 = scmp.ne.s32.totalorder %s106, %s120
      %p122 = scmp.eq.s32.totalorder %s28, 0
      %p123 = por %p121, %p122
      %s125 = sadd.s32 %s124, 1
      %p128 = scmp.eq.s32.totalorder %s22, 2
      %p129 = scmp.ne.s32.totalorder %s124, %s126
      %p130 = scmp.eq.s32.totalorder %s22, 0
      %p131 = por %p129, %p130
      %p132 = scmp.ne.s32.totalorder %s124, %s126
      %p133 = scmp.eq.s32.totalorder %s27, 2
      %p134 = por %p132, %p133
      %p135 = scmp.ne.s32.totalorder %s126, %s127
      %p136 = scmp.eq.s32.totalorder %s27, 0
      %p137 = por %p135, %p136
      %p138 = scmp.ne.s32.totalorder %s126, %s127
      %p139 = scmp.eq.s32.totalorder %s28, 2
      %p140 = por %p138, %p139
      %p142 = scmp.ne.s32.totalorder %s127, %s141
      %p143 = scmp.eq.s32.totalorder %s28, 0
      %p144 = por %p142, %p143
      %s146 = sadd.s32 %s145, 1
      %p149 = scmp.eq.s32.totalorder %s22, 2
      %p150 = scmp.ne.s32.totalorder %s145, %s147
      %p151 = scmp.eq.s32.totalorder %s22, 0
      %p152 = por %p150, %p151
      %p153 = scmp.ne.s32.totalorder %s145, %s147
      %p154 = scmp.eq.s32.totalorder %s27, 2
      %p155 = por %p153, %p154
      %p156 = scmp.ne.s32.totalorder %s147, %s148
      %p157 = scmp.eq.s32.totalorder %s27, 0
      %p158 = por %p156, %p157
      %p159 = scmp.ne.s32.totalorder %s147, %s148
      %p160 = scmp.eq.s32.totalorder %s28, 2
      %p161 = por %p159, %p160
      %p163 = scmp.ne.s32.totalorder %s148, %s162
      %p164 = scmp.eq.s32.totalorder %s28, 0
      %p165 = por %p163, %p164
      %s167 = sadd.s32 %s166, 1
      %p170 = scmp.eq.s32.totalorder %s22, 2
      %p171 = scmp.ne.s32.totalorder %s166, %s168
      %p172 = scmp.eq.s32.totalorder %s22, 0
      %p173 = por %p171, %p172
      %p174 = scmp.ne.s32.totalorder %s166, %s168
      %p175 = scmp.eq.s32.totalorder %s27, 2
      %p176 = por %p174, %p175
      %p177 = scmp.ne.s32.totalorder %s168, %s169
      %p178 = scmp.eq.s32.totalorder %s27, 0
      %p179 = por %p177, %p178
      %p180 = scmp.ne.s32.totalorder %s168, %s169
      %p181 = scmp.eq.s32.totalorder %s28, 2
      %p182 = por %p180, %p181
      %p184 = scmp.ne.s32.totalorder %s169, %s183
      %p185 = scmp.eq.s32.totalorder %s28, 0
      %p186 = por %p184, %p185
      %s187 = ssub.s32 %s22, %s29
      %p188 = scmp.eq.s32.totalorder %s187, 0
      %s190 = sadd.s32 %s189, 1
      %s191 = scalar_select %p188, %s189, %s190
      %p194 = pneg %p188
      %p195 = scmp.eq.s32.totalorder %s22, 2
      %p196 = por %p194, %p195
      %p197 = scmp.ne.s32.totalorder %s189, %s192
      %p198 = scmp.eq.s32.totalorder %s22, 0
      %p199 = por %p197, %p198
      %p200 = scmp.ne.s32.totalorder %s189, %s192
      %p201 = scmp.eq.s32.totalorder %s27, 2
      %p202 = por %p200, %p201
      %p203 = scmp.ne.s32.totalorder %s192, %s193
      %p204 = scmp.eq.s32.totalorder %s27, 0
      %p205 = por %p203, %p204
      %p206 = scmp.ne.s32.totalorder %s192, %s193
      %p207 = scmp.eq.s32.totalorder %s28, 2
      %p208 = por %p206, %p207
      %p210 = scmp.ne.s32.totalorder %s193, %s209
      %p211 = scmp.eq.s32.totalorder %s28, 0
      %p212 = por %p210, %p211
      %p213 = scmp.le.s32.totalorder 1, %s22
      %p214 = scmp.lt.s32.totalorder %s22, 4
      %p215 = pnand %p213, %p214
      %p216 = pneg %p215
      // Predicated region
      $region9: #{tpu_custom_call.1} parent=5 // pred_check
        _
      $region10: #{tpu_custom_call.1} parent=5 // pred_check_branch
        %218 = sbr.rel (%p215) target = $region12
      $region11: #{tpu_custom_call.1} parent=5 // pred_region
        %s219 = ssub.s32 %s22, 1
        // Predicated region
        $region13: #{tpu_custom_call.1} parent=11 // pred_check
          %p220 = pneg %p95
        $region14: #{tpu_custom_call.1} parent=11 // pred_check_branch
          %222 = sbr.rel (%p220) target = $region16
        $region15: #{tpu_custom_call.1} parent=11 // pred_region
          %s224 = ssub.s32 512, 512
          %225 = vsyncadd [#allocation6], %s224
          %s226 = sshll.u32 [#allocation7], 4
          %s227 = int_to_ptr.vmem [resolvable:$true] %s226
          %232 = dma.hbm_to_vmem [thread:$0]  %s2, 512, %s227, [#allocation6], 128, 128, 8
        $region16: #{tpu_custom_call.1} parent=11 // pred_fallthru
          _
        // Predicated region
        $region17: #{tpu_custom_call.1} parent=11 // pred_check
          %p233 = pneg %p116
        $region18: #{tpu_custom_call.1} parent=11 // pred_check_branch
          %235 = sbr.rel (%p233) target = $region20
        $region19: #{tpu_custom_call.1} parent=11 // pred_region
          %s237 = ssub.s32 512, 512
          %238 = vsyncadd [#allocation9], %s237
          %s239 = sshll.u32 [#allocation8], 4
          %s240 = int_to_ptr.vmem [resolvable:$true] %s239
          %245 = dma.hbm_to_vmem [thread:$0]  %s3, 512, %s240, [#allocation9], 128, 128, 8
        $region20: #{tpu_custom_call.1} parent=11 // pred_fallthru
          _
        // Predicated region
        $region21: #{tpu_custom_call.1} parent=11 // pred_check
          %p246 = pneg %p137
        $region22: #{tpu_custom_call.1} parent=11 // pred_check_branch
          %248 = sbr.rel (%p246) target = $region24
        $region23: #{tpu_custom_call.1} parent=11 // pred_region
          _
        $region24: #{tpu_custom_call.1} parent=11 // pred_fallthru
          _
        // Predicated region
        $region25: #{tpu_custom_call.1} parent=11 // pred_check
          %p249 = pneg %p158
        $region26: #{tpu_custom_call.1} parent=11 // pred_check_branch
          %251 = sbr.rel (%p249) target = $region28
        $region27: #{tpu_custom_call.1} parent=11 // pred_region
          _
        $region28: #{tpu_custom_call.1} parent=11 // pred_fallthru
          _
        // Predicated region
        $region29: #{tpu_custom_call.1} parent=11 // pred_check
          %p252 = pneg %p179
        $region30: #{tpu_custom_call.1} parent=11 // pred_check_branch
          %254 = sbr.rel (%p252) target = $region32
        $region31: #{tpu_custom_call.1} parent=11 // pred_region
          _
        $region32: #{tpu_custom_call.1} parent=11 // pred_fallthru
          _
      $region12: #{tpu_custom_call.1} parent=5 // pred_fallthru
        _
      %p255 = scmp.lt.s32.totalorder %s22, 3
      // Predicated region
      $region33: #{tpu_custom_call.1} parent=5 // pred_check
        %p256 = pneg %p255
      $region34: #{tpu_custom_call.1} parent=5 // pred_check_branch
        %258 = sbr.rel (%p256) target = $region36
      $region35: #{tpu_custom_call.1} parent=5 // pred_region
        // Predicated region
        $region37: #{tpu_custom_call.1} parent=35 // pred_check
          %p259 = pneg %p42
        $region38: #{tpu_custom_call.1} parent=35 // pred_check_branch
          %261 = sbr.rel (%p259) target = $region40
        $region39: #{tpu_custom_call.1} parent=35 // pred_region
          %s262 = sand.u32 %s32, 1
          %s263 = scalar_lea.sflag [#allocation4], %s262
          %s264 = sand.u32 %s32, 1
          %s265 = smul.addr %s264, 8
          %s266 = scalar_lea.vmem [#allocation3], %s265
          %s268 = ssub.s32 128, 128
          %269 = vsyncadd %s263, %s268
          %s270 = smul.addr %s22, 128
          %s271 = scalar_lea.hbm %s0, %s270
          %s273 = sshll.u32 %s266, 4
          %s274 = int_to_ptr.vmem [resolvable:$true] %s273
          %276 = dma.hbm_to_vmem [thread:$0]  %s271, 128, %s274, %s263
        $region40: #{tpu_custom_call.1} parent=35 // pred_fallthru
          _
        // Predicated region
        $region41: #{tpu_custom_call.1} parent=35 // pred_check
          %p277 = pneg %p68
        $region42: #{tpu_custom_call.1} parent=35 // pred_check_branch
          %279 = sbr.rel (%p277) target = $region44
        $region43: #{tpu_custom_call.1} parent=35 // pred_region
          %s280 = sand.u32 %s22, 1
          %s281 = scalar_lea.sflag [#allocation6], %s280
          %s282 = sand.u32 %s58, 1
          %s283 = smul.addr %s282, 8
          %s284 = scalar_lea.vmem [#allocation5], %s283
          %s286 = ssub.s32 128, 128
          %287 = vsyncadd %s281, %s286
          %s288 = smul.addr %s22, 128
          %s289 = scalar_lea.hbm %s1, %s288
          %s291 = sshll.u32 %s284, 4
          %s292 = int_to_ptr.vmem [resolvable:$true] %s291
          %294 = dma.hbm_to_vmem [thread:$0]  %s289, 128, %s292, %s281
        $region44: #{tpu_custom_call.1} parent=35 // pred_fallthru
          _
      $region36: #{tpu_custom_call.1} parent=5 // pred_fallthru
        _
      %p295 = scmp.le.s32.totalorder 1, %s22
      %p296 = scmp.lt.s32.totalorder %s22, 4
      %p297 = pnand %p295, %p296
      %p298 = pneg %p297
      // Predicated region
      $region45: #{tpu_custom_call.1} parent=5 // pred_check
        _
      $region46: #{tpu_custom_call.1} parent=5 // pred_check_branch
        %300 = sbr.rel (%p297) target = $region48
      $region47: #{tpu_custom_call.1} parent=5 // pred_region
        %s301 = ssub.s32 %s22, 1
        %s302 = sand.u32 %s35, 1
        %s303 = scalar_lea.sflag [#allocation4], %s302
        %s304 = sand.u32 %s35, 1
        %s305 = smul.addr %s304, 8
        %s306 = scalar_lea.vmem [#allocation3], %s305
        // Predicated region
        $region49: #{tpu_custom_call.1} parent=47 // pred_check
          %p307 = pneg %p48
        $region50: #{tpu_custom_call.1} parent=47 // pred_check_branch
          %309 = sbr.rel (%p307) target = $region52
        $region51: #{tpu_custom_call.1} parent=47 // pred_region
          %310 = dma.done %s303, 128
        $region52: #{tpu_custom_call.1} parent=47 // pred_fallthru
          _
        %s311 = sand.u32 %s27, 1
        %s312 = scalar_lea.sflag [#allocation6], %s311
        %s313 = sand.u32 %s61, 1
        %s314 = smul.addr %s313, 8
        %s315 = scalar_lea.vmem [#allocation5], %s314
        // Predicated region
        $region53: #{tpu_custom_call.1} parent=47 // pred_check
          %p316 = pneg %p74
        $region54: #{tpu_custom_call.1} parent=47 // pred_check_branch
          %318 = sbr.rel (%p316) target = $region56
        $region55: #{tpu_custom_call.1} parent=47 // pred_region
          %319 = dma.done %s312, 128
        $region56: #{tpu_custom_call.1} parent=47 // pred_fallthru
          _
        // Predicated region
        $region57: #{tpu_custom_call.1} parent=47 // pred_check
          %p320 = pneg %p95
        $region58: #{tpu_custom_call.1} parent=47 // pred_check_branch
          %322 = sbr.rel (%p320) target = $region60
        $region59: #{tpu_custom_call.1} parent=47 // pred_region
          %323 = dma.done [#allocation6], 512
        $region60: #{tpu_custom_call.1} parent=47 // pred_fallthru
          _
        // Predicated region
        $region61: #{tpu_custom_call.1} parent=47 // pred_check
          %p324 = pneg %p116
        $region62: #{tpu_custom_call.1} parent=47 // pred_check_branch
          %326 = sbr.rel (%p324) target = $region64
        $region63: #{tpu_custom_call.1} parent=47 // pred_region
          %327 = dma.done [#allocation9], 512
        $region64: #{tpu_custom_call.1} parent=47 // pred_fallthru
          _
        %s328 = sand.u32 %s35, 1
        %s329 = scalar_lea.sflag [#allocation4], %s328
        %s330 = sand.u32 %s35, 1
        %s331 = smul.addr %s330, 8
        %s332 = scalar_lea.vmem [#allocation3], %s331
        %p333 = pneg %p48
        %p334 = pneg %p45
        %s335 = sand.u32 %s27, 1
        %s336 = scalar_lea.sflag [#allocation6], %s335
        %s337 = sand.u32 %s61, 1
        %s338 = smul.addr %s337, 8
        %s339 = scalar_lea.vmem [#allocation5], %s338
        %p340 = pneg %p74
        %p341 = pneg %p71
        %p342 = pneg %p95
        %p343 = pneg %p92
        %p344 = pneg %p116
        %p345 = pneg %p113
        %p346 = pneg %p137
        %p347 = pneg %p134
        %p348 = pneg %p158
        %p349 = pneg %p155
        %p350 = pneg %p179
        %p351 = pneg %p176
        %p352 = pneg %p205
        %p353 = pneg %p202
        %p354 = scmp.lt.s32.totalorder %s27, 2
        %s355 = scalar_select %p354, %s27, 2
        %s356 = smul.addr %s355, 8
        %s357 = scalar_lea.vmem %s7, %s356
        %p358 = scmp.lt.s32.totalorder %s27, 2
        %s359 = scalar_select %p358, %s27, 2
        %s360 = smul.addr %s359, 8
        %s361 = scalar_lea.vmem %s7, %s360
        %v362 = vld [vmem:[%s306] sm:$0xff]
        %v363 = vld [vmem:[#allocation7] sm:$0xff]
        %v364 = vld [vmem:[#allocation7 + $0x8] sm:$0xff]
        %v365 = vld [vmem:[#allocation7 + $0x10] sm:$0xff]
        %v366 = vld [vmem:[#allocation7 + $0x18] sm:$0xff]
        %v367 = vld [vmem:[%s315] sm:$0xff]
        %v368 = vld [vmem:[#allocation8] sm:$0xff]
        %v369 = vld [vmem:[#allocation8 + $0x8] sm:$0xff]
        %v370 = vld [vmem:[#allocation8 + $0x10] sm:$0xff]
        %v371 = vld [vmem:[#allocation8 + $0x18] sm:$0xff]
        %vm372 = vcmask 261120
        %v374 = vsel %vm372, %v367, 0
        %376 = vmatprep.subr.mxu0 0.0
        %377 = vmatpush1.msra.mxu0 0.0
        %378 = vmatprep.subr.mxu0 0.0
        %379 = vmatpush1.msra.mxu0 0.0
        %380 = vmatprep.subr.mxu0 0.0
        %381 = vmatpush1.msra.mxu0 0.0
        %382 = vmatprep.subr.mxu0 0.0
        %383 = vmatpush1.msra.mxu0 0.0
        %384 = vmatprep.subr.mxu0 0.0
        %385 = vmatpush1.msra.mxu0 0.0
        %386 = vmatprep.subr.mxu0 0.0
        %387 = vmatpush1.msra.mxu0 0.0
        %388 = vmatprep.subr.mxu0 0.0
        %389 = vmatpush1.msra.mxu0 0.0
        %390 = vmatprep.subr.mxu0 0.0
        %391 = vmatpush1.msra.mxu0 0.0
        %392 = vmatprep.subr.mxu0 0.0
        %393 = vmatpush1.msra.mxu0 0.0
        %394 = vmatprep.subr.mxu0 0.0
        %395 = vmatpush1.msra.mxu0 0.0
        %396 = vmatprep.subr.mxu0 0.0
        %397 = vmatpush1.msra.mxu0 0.0
        %398 = vmatprep.subr.mxu0 0.0
        %399 = vmatpush1.msra.mxu0 0.0
        %400 = vmatprep.subr.mxu0 0.0
        %401 = vmatpush1.msra.mxu0 %v371
        %402 = vmatprep.subr.mxu0 0.0
        %403 = vmatpush1.msra.mxu0 %v370
        %404 = vmatprep.subr.mxu0 0.0
        %405 = vmatpush1.msra.mxu0 %v369
        %406 = vmatprep.subr.mxu0 0.0
        %407 = vmatpush1.msra.mxu0 %v368
        %408 = vmatprep.subr.mxu0 0.0
        %409 = vmatpush2.msra.mxu0 0.0
        %410 = vmatprep.subr.mxu0 0.0
        %411 = vmatpush2.msra.mxu0 0.0
        %412 = vmatprep.subr.mxu0 0.0
        %413 = vmatpush2.msra.mxu0 0.0
        %414 = vmatprep.subr.mxu0 0.0
        %415 = vmatpush2.msra.mxu0 0.0
        %416 = vmatprep.subr.mxu0 0.0
        %417 = vmatpush2.msra.mxu0 0.0
        %418 = vmatprep.subr.mxu0 0.0
        %419 = vmatpush2.msra.mxu0 0.0
        %420 = vmatprep.subr.mxu0 0.0
        %421 = vmatpush2.msra.mxu0 0.0
        %422 = vmatprep.subr.mxu0 0.0
        %423 = vmatpush2.msra.mxu0 0.0
        %424 = vmatprep.subr.mxu0 0.0
        %425 = vmatpush2.msra.mxu0 0.0
        %426 = vmatprep.subr.mxu0 0.0
        %427 = vmatpush2.msra.mxu0 0.0
        %428 = vmatprep.subr.mxu0 0.0
        %429 = vmatpush2.msra.mxu0 0.0
        %430 = vmatprep.subr.mxu0 0.0
        %431 = vmatpush2.msra.mxu0 0.0
        %432 = vmatprep.subr.mxu0 0.0
        %433 = vmatpush2.msra.mxu0 0.0
        %434 = vmatprep.subr.mxu0 0.0
        %435 = vmatpush2.msra.mxu0 0.0
        %436 = vmatprep.subr.mxu0 0.0
        %437 = vmatpush2.msra.mxu0 0.0
        %438 = vmatprep.subr.mxu0 0.0
        %439 = vmatpush2.msra.mxu0 0.0
        %440 = vmatprep.mubr.f32.mxu0 0.0
        %441 = vmatmul.mubr.f32.gmra.mxu0 %v374
        %v442 = vpop.f32.mrf.mxu0
        %v443 = vadd.f32 0.0, %v442
        %v444 = vpop.f32.mrf.mxu0
        %445 = vdwg.mxu0
        %v447 = vsel %vm372, %v362, 0
        %449 = vmatprep.subr.mxu0 0.0
        %450 = vmatpush1.msra.mxu0 0.0
        %451 = vmatprep.subr.mxu0 0.0
        %452 = vmatpush1.msra.mxu0 0.0
        %453 = vmatprep.subr.mxu0 0.0
        %454 = vmatpush1.msra.mxu0 0.0
        %455 = vmatprep.subr.mxu0 0.0
        %456 = vmatpush1.msra.mxu0 0.0
        %457 = vmatprep.subr.mxu0 0.0
        %458 = vmatpush1.msra.mxu0 0.0
        %459 = vmatprep.subr.mxu0 0.0
        %460 = vmatpush1.msra.mxu0 0.0
        %461 = vmatprep.subr.mxu0 0.0
        %462 = vmatpush1.msra.mxu0 0.0
        %463 = vmatprep.subr.mxu0 0.0
        %464 = vmatpush1.msra.mxu0 0.0
        %465 = vmatprep.subr.mxu0 0.0
        %466 = vmatpush1.msra.mxu0 0.0
        %467 = vmatprep.subr.mxu0 0.0
        %468 = vmatpush1.msra.mxu0 0.0
        %469 = vmatprep.subr.mxu0 0.0
        %470 = vmatpush1.msra.mxu0 0.0
        %471 = vmatprep.subr.mxu0 0.0
        %472 = vmatpush1.msra.mxu0 0.0
        %473 = vmatprep.subr.mxu0 0.0
        %474 = vmatpush1.msra.mxu0 %v366
        %475 = vmatprep.subr.mxu0 0.0
        %476 = vmatpush1.msra.mxu0 %v365
        %477 = vmatprep.subr.mxu0 0.0
        %478 = vmatpush1.msra.mxu0 %v364
        %479 = vmatprep.subr.mxu0 0.0
        %480 = vmatpush1.msra.mxu0 %v363
        %481 = vmatprep.subr.mxu0 0.0
        %482 = vmatpush2.msra.mxu0 0.0
        %483 = vmatprep.subr.mxu0 0.0
        %484 = vmatpush2.msra.mxu0 0.0
        %485 = vmatprep.subr.mxu0 0.0
        %486 = vmatpush2.msra.mxu0 0.0
        %487 = vmatprep.subr.mxu0 0.0
        %488 = vmatpush2.msra.mxu0 0.0
        %489 = vmatprep.subr.mxu0 0.0
        %490 = vmatpush2.msra.mxu0 0.0
        %491 = vmatprep.subr.mxu0 0.0
        %492 = vmatpush2.msra.mxu0 0.0
        %493 = vmatprep.subr.mxu0 0.0
        %494 = vmatpush2.msra.mxu0 0.0
        %495 = vmatprep.subr.mxu0 0.0
        %496 = vmatpush2.msra.mxu0 0.0
        %497 = vmatprep.subr.mxu0 0.0
        %498 = vmatpush2.msra.mxu0 0.0
        %499 = vmatprep.subr.mxu0 0.0
        %500 = vmatpush2.msra.mxu0 0.0
        %501 = vmatprep.subr.mxu0 0.0
        %502 = vmatpush2.msra.mxu0 0.0
        %503 = vmatprep.subr.mxu0 0.0
        %504 = vmatpush2.msra.mxu0 0.0
        %505 = vmatprep.subr.mxu0 0.0
        %506 = vmatpush2.msra.mxu0 0.0
        %507 = vmatprep.subr.mxu0 0.0
        %508 = vmatpush2.msra.mxu0 0.0
        %509 = vmatprep.subr.mxu0 0.0
        %510 = vmatpush2.msra.mxu0 0.0
        %511 = vmatprep.subr.mxu0 0.0
        %512 = vmatpush2.msra.mxu0 0.0
        %513 = vmatprep.mubr.f32.mxu0 0.0
        %514 = vmatmul.mubr.f32.gmra.mxu0 %v447
        %v515 = vpop.f32.mrf.mxu0
        %v516 = vadd.f32 %v443, %v515
        %v517 = vpop.f32.mrf.mxu0
        %518 = vdwg.mxu0
        %v519 = vld [vmem:[%s4] sm:$0x1]
        %v521 = vlaneseq
        %v522 = vshrl.u32 %v521, 7
        %v523 = vsub.s32 0, %v522
        %v524 = vrot.slane %v519, %v523
        %v526 = vadd.f32 %v516, %v524
        %v527 = vmax.f32 %v526, 0.0
        %v528 = vld [vmem:[%s5] sm:$0x1]
        %v530 = vlaneseq
        %v531 = vshrl.u32 %v530, 7
        %v532 = vsub.s32 0, %v531
        %v533 = vrot.slane %v528, %v532
        %v535 = vmul.f32 %v527, %v533
        %v536 = vsel %vm372, %v535, 0.0
        %537 = vadd.xlane.f32.xlu0 %v536
        %v538 = vpop.xlane.xlu0 %537
        %v539 = vld [vmem:[#allocation2] sm:$0x1]
        %v541 = vlaneseq
        %v542 = vshrl.u32 %v541, 7
        %v543 = vsub.s32 0, %v542
        %v544 = vrot.slane %v539, %v543
        %v546 = vadd.f32 %v538, %v544
        %vm547 = vcmask 7168
        %548 = vst.msk [vmem:[%s361] sm:$0xff] %vm547, %v546
        %p549 = scmp.lt.s32.totalorder %s27, 2
        %s550 = scalar_select %p549, %s27, 2
        %s551 = smul.addr %s550, 8
        %s552 = scalar_lea.vmem %s7, %s551
        // Predicated region
        $region65: #{tpu_custom_call.1} parent=47 // pred_check
          %p553 = pneg %p202
        $region66: #{tpu_custom_call.1} parent=47 // pred_check_branch
          %555 = sbr.rel (%p553) target = $region68
        $region67: #{tpu_custom_call.1} parent=47 // pred_region
          _
        $region68: #{tpu_custom_call.1} parent=47 // pred_fallthru
          _
      $region48: #{tpu_custom_call.1} parent=5 // pred_fallthru
        _
      %p556 = scmp.le.s32.totalorder 2, %s22
      // Predicated region
      $region69: #{tpu_custom_call.1} parent=5 // pred_check
        %p557 = pneg %p556
      $region70: #{tpu_custom_call.1} parent=5 // pred_check_branch
        %559 = sbr.rel (%p557) target = $region72
      $region71: #{tpu_custom_call.1} parent=5 // pred_region
        %s560 = ssub.s32 %s22, 2
        // Predicated region
        $region73: #{tpu_custom_call.1} parent=71 // pred_check
          %p561 = pneg %p208
        $region74: #{tpu_custom_call.1} parent=71 // pred_check_branch
          %563 = sbr.rel (%p561) target = $region76
        $region75: #{tpu_custom_call.1} parent=71 // pred_region
          %p564 = scmp.lt.s32.totalorder %s28, 2
          %s565 = scalar_select %p564, %s28, 2
          %s566 = smul.addr %s565, 8
          %s567 = scalar_lea.vmem %s7, %s566
        $region76: #{tpu_custom_call.1} parent=71 // pred_fallthru
          _
      $region72: #{tpu_custom_call.1} parent=5 // pred_fallthru
        _
    $region6: #{tpu_custom_call.1} parent=1 // loop_footer
      %s26 = sadd.s32 1, %s22
    $region7: #{tpu_custom_call.1} parent=1 // loop_footer_branch
      %21 = sbr.rel target = $region3
    $region8: #{tpu_custom_call.1} parent=1 // loop_exit
      _
    %568 = vsyncpa [#allocation4], 1
    %s569 = scalar_lea.sflag [#allocation4], 1
    %570 = vsyncpa %s569, 1
    %571 = vsyncpa [#allocation6], 1
    %s572 = scalar_lea.sflag [#allocation6], 1
    %573 = vsyncpa %s572, 1
    %574 = vsyncpa [#allocation9], 1

</llo_original>
